<compile_context>
chip_gen: v7x
topology: tpu7x:2x2x1
jax: 0.10.0
libtpu: 0.0.40
codegen_flags: <defaults>
</compile_context>

<pallas_src>
import jax
import jax.numpy as jnp
from jax.experimental import pallas as pl
from jax.experimental.pallas import tpu as pltpu

N_STATES = 3        # Pendulum-v1 observation dim
N_ACTIONS = 1       # Pendulum-v1 action dim (output VPU-reduction path assumes 1)
HIDDEN = 128
N_HID = 3           # number of 128x128 hidden layers per branch
W2 = 2 * HIDDEN     # fused lane width: [mu-branch | log_var-branch]

# packed-parameter row offsets (multiples of 16 -> bf16 sublane-tile aligned)
R_IN_W = 0
R_IN_B = N_STATES
R_HID_W = 16
R_HID_B = R_HID_W + N_HID * HIDDEN      # 400
R_OUT_W = R_HID_B + 16                  # 416
R_OUT_B = R_OUT_W + 1                   # 417
R_TOTAL = R_OUT_W + 16                  # 432


def source_kernel(sx_ref, p_ref, out_ref):
    f32 = jnp.float32
    bf16 = jnp.bfloat16

    sx = sx_ref[...]                                    # (1, n_states + n_actions) f32
    s = sx[:, 0:N_STATES]
    eps = sx[:, N_STATES:N_STATES + N_ACTIONS]

    # ---- fused input layer: one matmul feeds both branches ----
    z = (jnp.dot(s, p_ref[R_IN_W:R_IN_W + N_STATES, :].astype(f32),
                 preferred_element_type=f32)
         + p_ref[R_IN_B:R_IN_B + 1, :].astype(f32))     # (1, 256)
    h = jnp.tanh(z[:, 0:HIDDEN])                        # mu branch      (1, 128) f32
    g = jnp.maximum(z[:, HIDDEN:W2], 0.0)               # log_var branch (1, 128) f32

    # ---- 3 hidden layers per branch (bf16 MXU dots, f32 accumulate) ----
    for i in range(N_HID):
        r = R_HID_W + i * HIDDEN
        b = p_ref[R_HID_B + i:R_HID_B + i + 1, :].astype(f32)            # (1, 256)
        h = jnp.tanh(
            jnp.dot(h.astype(bf16), p_ref[r:r + HIDDEN, 0:HIDDEN],
                    preferred_element_type=f32) + b[:, 0:HIDDEN])
        g = jnp.maximum(
            jnp.dot(g.astype(bf16), p_ref[r:r + HIDDEN, HIDDEN:W2],
                    preferred_element_type=f32) + b[:, HIDDEN:W2], 0.0)

    # ---- output layer as VPU multiply + lane reduction (n_actions == 1) ----
    wo = p_ref[R_OUT_W:R_OUT_W + 1, :].astype(f32)      # (1, 256)
    bo = p_ref[R_OUT_B:R_OUT_B + 1, :].astype(f32)      # (1, 256)
    mu = (jnp.sum(h * wo[:, 0:HIDDEN], axis=-1, keepdims=True)
          + bo[:, 0:N_ACTIONS])                         # (1, 1)
    lv = (jnp.sum(g * wo[:, HIDDEN:W2], axis=-1, keepdims=True)
          + bo[:, HIDDEN:HIDDEN + N_ACTIONS])           # (1, 1)

    # ---- reparameterize: std = exp(0.5*logvar) + 1e-5 ; act = mu + std * eps ----
    std = jnp.exp(0.5 * lv) + 1e-5
    act = mu + std * eps

    # merged (1, 3) output: [act | mu | log_var]
    lane = jax.lax.broadcasted_iota(jnp.int32, (1, 3 * N_ACTIONS), 1)
    out_ref[...] = jnp.where(lane < N_ACTIONS, act,
                             jnp.where(lane < 2 * N_ACTIONS, mu, lv))


def init_params(key, n_states=N_STATES, n_actions=N_ACTIONS, hidden=HIDDEN):
    """Deterministic init mirroring torch nn.Linear default U(-1/sqrt(fan_in), +); bf16 storage."""
    ks = jax.random.split(key, 4 * (2 + N_HID))
    it = iter(ks)

    def lin(fan_in, fan_out):
        kw, kb = next(it), next(it)
        bound = 1.0 / (fan_in ** 0.5)
        w = jax.random.uniform(kw, (fan_in, fan_out), jnp.float32, -bound, bound)
        b = jax.random.uniform(kb, (1, fan_out), jnp.float32, -bound, bound)
        return w.astype(jnp.bfloat16), b.astype(jnp.bfloat16)

    def branch():
        w_in, b_in = lin(n_states, hidden)
        hid = [lin(hidden, hidden) for _ in range(N_HID)]
        w_out, b_out = lin(hidden, n_actions)
        return dict(w_in=w_in, b_in=b_in,
                    w_hid=jnp.stack([w for w, _ in hid]),
                    b_hid=jnp.stack([b for _, b in hid]),
                    w_out=w_out, b_out=b_out)

    return {"mu": branch(), "lv": branch()}


def pack_params(params):
    """Pack both branches into a single lane-dense bf16 (R_TOTAL, 256) buffer."""
    pm, pv = params["mu"], params["lv"]
    buf = jnp.zeros((R_TOTAL, W2), jnp.bfloat16)
    buf = buf.at[R_IN_W:R_IN_W + N_STATES, :].set(
        jnp.concatenate([pm["w_in"], pv["w_in"]], axis=1))
    buf = buf.at[R_IN_B:R_IN_B + 1, :].set(
        jnp.concatenate([pm["b_in"], pv["b_in"]], axis=1))
    for i in range(N_HID):
        buf = buf.at[R_HID_W + i * HIDDEN:R_HID_W + (i + 1) * HIDDEN, :].set(
            jnp.concatenate([pm["w_hid"][i], pv["w_hid"][i]], axis=1))
        buf = buf.at[R_HID_B + i:R_HID_B + i + 1, :].set(
            jnp.concatenate([pm["b_hid"][i], pv["b_hid"][i]], axis=1))
    buf = buf.at[R_OUT_W:R_OUT_W + 1, :].set(
        jnp.concatenate([pm["w_out"].T, pv["w_out"].T], axis=1))
    buf = buf.at[R_OUT_B:R_OUT_B + 1, 0:N_ACTIONS].set(pm["b_out"])
    buf = buf.at[R_OUT_B:R_OUT_B + 1, HIDDEN:HIDDEN + N_ACTIONS].set(pv["b_out"])
    return buf


def source_forward(s, eps, packed):
    """s: (n_states,) state. eps: (1, n_actions) uniform noise. packed: (432,256) bf16."""
    sx = jnp.concatenate([s.astype(jnp.float32).reshape(1, -1),
                          eps.astype(jnp.float32).reshape(1, -1)], axis=-1)

    vmem = pl.BlockSpec(memory_space=pltpu.MemorySpace.VMEM)
    flops = 2 * (N_STATES * W2 + N_HID * 2 * HIDDEN * HIDDEN + 2 * HIDDEN)
    bytes_accessed = (packed.size * packed.dtype.itemsize
                      + sx.size * 4 + 3 * N_ACTIONS * 4)
    cost = pl.CostEstimate(flops=flops,
                           transcendentals=(N_HID + 1) * HIDDEN + N_ACTIONS,
                           bytes_accessed=bytes_accessed)

    out = pl.pallas_call(
        source_kernel,
        out_shape=jax.ShapeDtypeStruct((1, 3 * N_ACTIONS), jnp.float32),
        in_specs=[vmem, vmem],
        out_specs=vmem,
        cost_estimate=cost,
    )(sx, packed)

    act = out[:, 0:N_ACTIONS]
    mu = out[:, N_ACTIONS:2 * N_ACTIONS]
    lv = out[:, 2 * N_ACTIONS:3 * N_ACTIONS]
    return act, mu, lv


def source_forward_ref(s, eps, params):
    """Pure-JAX reference with the identical numeric recipe (bf16 weights, f32 accumulate)."""
    f32, bf16 = jnp.float32, jnp.bfloat16
    x = s.astype(f32).reshape(1, -1)

    def branch(p, act_fn):
        h = act_fn(jnp.dot(x, p["w_in"].astype(f32), preferred_element_type=f32)
                   + p["b_in"].astype(f32))
        for i in range(N_HID):
            h = act_fn(jnp.dot(h.astype(bf16), p["w_hid"][i],
                               preferred_element_type=f32) + p["b_hid"][i].astype(f32))
        return (jnp.sum(h * p["w_out"].T.astype(f32), axis=-1, keepdims=True)
                + p["b_out"].astype(f32))

    mu = branch(params["mu"], jnp.tanh)
    lv = branch(params["lv"], lambda v: jnp.maximum(v, 0.0))
    std = jnp.exp(0.5 * lv) + 1e-5
    return mu + std * eps.astype(f32), mu, lv


if __name__ == "__main__":
    key = jax.random.PRNGKey(0)
    k_params, k_state, k_eps = jax.random.split(key, 3)

    params = init_params(k_params)
    packed = pack_params(params)
    s = jax.random.normal(k_state, (N_STATES,), jnp.float32)        # pendulum state
    eps = jax.random.uniform(k_eps, (1, N_ACTIONS), jnp.float32)    # == torch.rand_like(std)

    act, mu, lv = source_forward(s, eps, packed)
    jax.block_until_ready((act, mu, lv))

    act_r, mu_r, lv_r = source_forward_ref(s, eps, params)
    assert jnp.allclose(act, act_r, rtol=2e-3, atol=2e-3), (act, act_r)
    assert jnp.allclose(mu, mu_r, rtol=2e-3, atol=2e-3), (mu, mu_r)
    assert jnp.allclose(lv, lv_r, rtol=2e-3, atol=2e-3), (lv, lv_r)

    print("KERNEL_OK")
</pallas_src>

<mosaic_0001>
module attributes {stable_mosaic.version = 11 : i64} {
  func.func @source_kernel(%arg0: memref<1x4xf32, #tpu.memory_space<vmem>>, %arg1: memref<432x256xbf16, #tpu.memory_space<vmem>>, %arg2: memref<1x3xf32, #tpu.memory_space<vmem>>) attributes {dimension_semantics = [], scalar_prefetch = 0 : i64, scratch_operands = 0 : i64, tpu.core_type = #tpu.core_type<tc>} {
    %c0 = arith.constant 0 : index
    %c0_0 = arith.constant 0 : index
    %0 = vector.load %arg0[%c0, %c0_0] : memref<1x4xf32, #tpu.memory_space<vmem>>, vector<1x4xf32>
    %1 = vector.extract_strided_slice %0 {offsets = [0, 0], sizes = [1, 3], strides = [1, 1]} : vector<1x4xf32> to vector<1x3xf32>
    %2 = vector.extract_strided_slice %0 {offsets = [0, 3], sizes = [1, 1], strides = [1, 1]} : vector<1x4xf32> to vector<1x1xf32>
    %c0_1 = arith.constant 0 : index
    %c0_2 = arith.constant 0 : index
    %3 = vector.load %arg1[%c0_1, %c0_2] : memref<432x256xbf16, #tpu.memory_space<vmem>>, vector<3x256xbf16>
    %4 = arith.extf %3 : vector<3x256xbf16> to vector<3x256xf32>
    %cst = arith.constant dense<0.000000e+00> : vector<1x256xf32>
    %5 = tpu.matmul %1, %4, %cst {dimension_numbers = #tpu.dot_dimension_numbers<[1], [0], [0], [1], [0, 0, 1, 1], [], []>} : vector<1x3xf32>, vector<3x256xf32>, vector<1x256xf32> -> vector<1x256xf32>
    %c3 = arith.constant 3 : index
    %c0_3 = arith.constant 0 : index
    %6 = vector.load %arg1[%c3, %c0_3] : memref<432x256xbf16, #tpu.memory_space<vmem>>, vector<1x256xbf16>
    %7 = arith.extf %6 : vector<1x256xbf16> to vector<1x256xf32>
    %8 = arith.addf %5, %7 : vector<1x256xf32>
    %9 = vector.extract_strided_slice %8 {offsets = [0, 0], sizes = [1, 128], strides = [1, 1]} : vector<1x256xf32> to vector<1x128xf32>
    %10 = math.tanh %9 : vector<1x128xf32>
    %11 = vector.extract_strided_slice %8 {offsets = [0, 128], sizes = [1, 128], strides = [1, 1]} : vector<1x256xf32> to vector<1x128xf32>
    %cst_4 = arith.constant 0.000000e+00 : f32
    %12 = vector.broadcast %cst_4 : f32 to vector<1x128xf32>
    %13 = arith.maximumf %11, %12 : vector<1x128xf32>
    %c400 = arith.constant 400 : index
    %c0_5 = arith.constant 0 : index
    %14 = vector.load %arg1[%c400, %c0_5] : memref<432x256xbf16, #tpu.memory_space<vmem>>, vector<1x256xbf16>
    %15 = arith.extf %14 : vector<1x256xbf16> to vector<1x256xf32>
    %16 = arith.truncf %10 : vector<1x128xf32> to vector<1x128xbf16>
    %c16 = arith.constant 16 : index
    %c0_6 = arith.constant 0 : index
    %17 = vector.load %arg1[%c16, %c0_6] : memref<432x256xbf16, #tpu.memory_space<vmem>>, vector<128x128xbf16>
    %cst_7 = arith.constant dense<0.000000e+00> : vector<1x128xf32>
    %18 = tpu.matmul %16, %17, %cst_7 {dimension_numbers = #tpu.dot_dimension_numbers<[1], [0], [0], [1], [0, 0, 1, 1], [], []>} : vector<1x128xbf16>, vector<128x128xbf16>, vector<1x128xf32> -> vector<1x128xf32>
    %19 = vector.extract_strided_slice %15 {offsets = [0, 0], sizes = [1, 128], strides = [1, 1]} : vector<1x256xf32> to vector<1x128xf32>
    %20 = arith.addf %18, %19 : vector<1x128xf32>
    %21 = math.tanh %20 : vector<1x128xf32>
    %22 = arith.truncf %13 : vector<1x128xf32> to vector<1x128xbf16>
    %c16_8 = arith.constant 16 : index
    %c128 = arith.constant 128 : index
    %23 = vector.load %arg1[%c16_8, %c128] : memref<432x256xbf16, #tpu.memory_space<vmem>>, vector<128x128xbf16>
    %cst_9 = arith.constant dense<0.000000e+00> : vector<1x128xf32>
    %24 = tpu.matmul %22, %23, %cst_9 {dimension_numbers = #tpu.dot_dimension_numbers<[1], [0], [0], [1], [0, 0, 1, 1], [], []>} : vector<1x128xbf16>, vector<128x128xbf16>, vector<1x128xf32> -> vector<1x128xf32>
    %25 = vector.extract_strided_slice %15 {offsets = [0, 128], sizes = [1, 128], strides = [1, 1]} : vector<1x256xf32> to vector<1x128xf32>
    %26 = arith.addf %24, %25 : vector<1x128xf32>
    %cst_10 = arith.constant 0.000000e+00 : f32
    %27 = vector.broadcast %cst_10 : f32 to vector<1x128xf32>
    %28 = arith.maximumf %26, %27 : vector<1x128xf32>
    %c401 = arith.constant 401 : index
    %c0_11 = arith.constant 0 : index
    %29 = vector.load %arg1[%c401, %c0_11] : memref<432x256xbf16, #tpu.memory_space<vmem>>, vector<1x256xbf16>
    %30 = arith.extf %29 : vector<1x256xbf16> to vector<1x256xf32>
    %31 = arith.truncf %21 : vector<1x128xf32> to vector<1x128xbf16>
    %c144 = arith.constant 144 : index
    %c0_12 = arith.constant 0 : index
    %32 = vector.load %arg1[%c144, %c0_12] : memref<432x256xbf16, #tpu.memory_space<vmem>>, vector<128x128xbf16>
    %cst_13 = arith.constant dense<0.000000e+00> : vector<1x128xf32>
    %33 = tpu.matmul %31, %32, %cst_13 {dimension_numbers = #tpu.dot_dimension_numbers<[1], [0], [0], [1], [0, 0, 1, 1], [], []>} : vector<1x128xbf16>, vector<128x128xbf16>, vector<1x128xf32> -> vector<1x128xf32>
    %34 = vector.extract_strided_slice %30 {offsets = [0, 0], sizes = [1, 128], strides = [1, 1]} : vector<1x256xf32> to vector<1x128xf32>
    %35 = arith.addf %33, %34 : vector<1x128xf32>
    %36 = math.tanh %35 : vector<1x128xf32>
    %37 = arith.truncf %28 : vector<1x128xf32> to vector<1x128xbf16>
    %c144_14 = arith.constant 144 : index
    %c128_15 = arith.constant 128 : index
    %38 = vector.load %arg1[%c144_14, %c128_15] : memref<432x256xbf16, #tpu.memory_space<vmem>>, vector<128x128xbf16>
    %cst_16 = arith.constant dense<0.000000e+00> : vector<1x128xf32>
    %39 = tpu.matmul %37, %38, %cst_16 {dimension_numbers = #tpu.dot_dimension_numbers<[1], [0], [0], [1], [0, 0, 1, 1], [], []>} : vector<1x128xbf16>, vector<128x128xbf16>, vector<1x128xf32> -> vector<1x128xf32>
    %40 = vector.extract_strided_slice %30 {offsets = [0, 128], sizes = [1, 128], strides = [1, 1]} : vector<1x256xf32> to vector<1x128xf32>
    %41 = arith.addf %39, %40 : vector<1x128xf32>
    %cst_17 = arith.constant 0.000000e+00 : f32
    %42 = vector.broadcast %cst_17 : f32 to vector<1x128xf32>
    %43 = arith.maximumf %41, %42 : vector<1x128xf32>
    %c402 = arith.constant 402 : index
    %c0_18 = arith.constant 0 : index
    %44 = vector.load %arg1[%c402, %c0_18] : memref<432x256xbf16, #tpu.memory_space<vmem>>, vector<1x256xbf16>
    %45 = arith.extf %44 : vector<1x256xbf16> to vector<1x256xf32>
    %46 = arith.truncf %36 : vector<1x128xf32> to vector<1x128xbf16>
    %c272 = arith.constant 272 : index
    %c0_19 = arith.constant 0 : index
    %47 = vector.load %arg1[%c272, %c0_19] : memref<432x256xbf16, #tpu.memory_space<vmem>>, vector<128x128xbf16>
    %cst_20 = arith.constant dense<0.000000e+00> : vector<1x128xf32>
    %48 = tpu.matmul %46, %47, %cst_20 {dimension_numbers = #tpu.dot_dimension_numbers<[1], [0], [0], [1], [0, 0, 1, 1], [], []>} : vector<1x128xbf16>, vector<128x128xbf16>, vector<1x128xf32> -> vector<1x128xf32>
    %49 = vector.extract_strided_slice %45 {offsets = [0, 0], sizes = [1, 128], strides = [1, 1]} : vector<1x256xf32> to vector<1x128xf32>
    %50 = arith.addf %48, %49 : vector<1x128xf32>
    %51 = math.tanh %50 : vector<1x128xf32>
    %52 = arith.truncf %43 : vector<1x128xf32> to vector<1x128xbf16>
    %c272_21 = arith.constant 272 : index
    %c128_22 = arith.constant 128 : index
    %53 = vector.load %arg1[%c272_21, %c128_22] : memref<432x256xbf16, #tpu.memory_space<vmem>>, vector<128x128xbf16>
    %cst_23 = arith.constant dense<0.000000e+00> : vector<1x128xf32>
    %54 = tpu.matmul %52, %53, %cst_23 {dimension_numbers = #tpu.dot_dimension_numbers<[1], [0], [0], [1], [0, 0, 1, 1], [], []>} : vector<1x128xbf16>, vector<128x128xbf16>, vector<1x128xf32> -> vector<1x128xf32>
    %55 = vector.extract_strided_slice %45 {offsets = [0, 128], sizes = [1, 128], strides = [1, 1]} : vector<1x256xf32> to vector<1x128xf32>
    %56 = arith.addf %54, %55 : vector<1x128xf32>
    %cst_24 = arith.constant 0.000000e+00 : f32
    %57 = vector.broadcast %cst_24 : f32 to vector<1x128xf32>
    %58 = arith.maximumf %56, %57 : vector<1x128xf32>
    %c416 = arith.constant 416 : index
    %c0_25 = arith.constant 0 : index
    %59 = vector.load %arg1[%c416, %c0_25] : memref<432x256xbf16, #tpu.memory_space<vmem>>, vector<1x256xbf16>
    %60 = arith.extf %59 : vector<1x256xbf16> to vector<1x256xf32>
    %c417 = arith.constant 417 : index
    %c0_26 = arith.constant 0 : index
    %61 = vector.load %arg1[%c417, %c0_26] : memref<432x256xbf16, #tpu.memory_space<vmem>>, vector<1x256xbf16>
    %62 = arith.extf %61 : vector<1x256xbf16> to vector<1x256xf32>
    %63 = vector.extract_strided_slice %60 {offsets = [0, 0], sizes = [1, 128], strides = [1, 1]} : vector<1x256xf32> to vector<1x128xf32>
    %64 = arith.mulf %51, %63 : vector<1x128xf32>
    %cst_27 = arith.constant dense<0.000000e+00> : vector<1xf32>
    %65 = vector.multi_reduction <add>, %64, %cst_27 [1] : vector<1x128xf32> to vector<1xf32>
    %66 = vector.shape_cast %65 : vector<1xf32> to vector<1x1xf32>
    %67 = vector.extract_strided_slice %62 {offsets = [0, 0], sizes = [1, 1], strides = [1, 1]} : vector<1x256xf32> to vector<1x1xf32>
    %68 = arith.addf %66, %67 : vector<1x1xf32>
    %69 = vector.extract_strided_slice %60 {offsets = [0, 128], sizes = [1, 128], strides = [1, 1]} : vector<1x256xf32> to vector<1x128xf32>
    %70 = arith.mulf %58, %69 : vector<1x128xf32>
    %cst_28 = arith.constant dense<0.000000e+00> : vector<1xf32>
    %71 = vector.multi_reduction <add>, %70, %cst_28 [1] : vector<1x128xf32> to vector<1xf32>
    %72 = vector.shape_cast %71 : vector<1xf32> to vector<1x1xf32>
    %73 = vector.extract_strided_slice %62 {offsets = [0, 128], sizes = [1, 1], strides = [1, 1]} : vector<1x256xf32> to vector<1x1xf32>
    %74 = arith.addf %72, %73 : vector<1x1xf32>
    %cst_29 = arith.constant 5.000000e-01 : f32
    %75 = vector.broadcast %cst_29 : f32 to vector<1x1xf32>
    %76 = arith.mulf %75, %74 : vector<1x1xf32>
    %77 = math.exp %76 : vector<1x1xf32>
    %cst_30 = arith.constant 9.99999974E-6 : f32
    %78 = vector.broadcast %cst_30 : f32 to vector<1x1xf32>
    %79 = arith.addf %77, %78 : vector<1x1xf32>
    %80 = arith.mulf %79, %2 : vector<1x1xf32>
    %81 = arith.addf %68, %80 : vector<1x1xf32>
    %82 = tpu.iota {dimensions = array<i32: 1>} : vector<1x3xi32>
    %c1_i32 = arith.constant 1 : i32
    %83 = vector.broadcast %c1_i32 : i32 to vector<1x3xi32>
    %84 = arith.cmpi slt, %82, %83 : vector<1x3xi32>
    %c2_i32 = arith.constant 2 : i32
    %85 = vector.broadcast %c2_i32 : i32 to vector<1x3xi32>
    %86 = arith.cmpi slt, %82, %85 : vector<1x3xi32>
    %87 = vector.shape_cast %68 : vector<1x1xf32> to vector<1x1xf32>
    %88 = vector.broadcast %87 : vector<1x1xf32> to vector<1x3xf32>
    %89 = vector.shape_cast %74 : vector<1x1xf32> to vector<1x1xf32>
    %90 = vector.broadcast %89 : vector<1x1xf32> to vector<1x3xf32>
    %91 = arith.select %86, %88, %90 : vector<1x3xi1>, vector<1x3xf32>
    %92 = vector.shape_cast %81 : vector<1x1xf32> to vector<1x1xf32>
    %93 = vector.broadcast %92 : vector<1x1xf32> to vector<1x3xf32>
    %94 = arith.select %84, %93, %91 : vector<1x3xi1>, vector<1x3xf32>
    %c0_31 = arith.constant 0 : index
    %c0_32 = arith.constant 0 : index
    %95 = vector.load %arg2[%c0_31, %c0_32] : memref<1x3xf32, #tpu.memory_space<vmem>>, vector<1x3xf32>
    tpu.vector_store %arg2[%c0_31, %c0_32], %94 {strides = array<i32>} : memref<1x3xf32, #tpu.memory_space<vmem>>, vector<1x3xf32>,
    return
  }
}

</mosaic_0001>

<llo_original>
// kernel: tpu_custom_call.1
$region0: #{tpu_custom_call.1}
  #allocation0 [shape = 'u32[]', space=smem, size = 0x4, offset = 0x4, fixed_abs, tag = 'smem constant byte address 0x4 - core index']
  #allocation1 [shape = 'u32[144,128]{1,0:T(1,128)}', space=vmem, size = 0x12000, scoped, tag = 'internal scratch']
  %s0 = inlined_call_operand.hbm [shape: f32[1,4], index: 0, kind: input, shape index: {}]
  %s1 = inlined_call_operand.hbm [shape: bf16[432,256], index: 1, kind: input, shape index: {}]
  %s2 = inlined_call_operand.hbm [shape: f32[1,3], index: 2, kind: output, shape index: {}]
  %s3 = sld [smem:[#allocation0]]
  $region26: #{tpu_custom_call.1} parent=0
    _
  %s5 = ssub.s32 1, %s3
  %s6 = scalar_select 0, %s5, %s3
  $region1: #{tpu_custom_call.1} parent=0
    #allocation2 [shape = 'u8[512]{0}', space=vmem, size = 0x400, scoped, tag = 'input window, operand 0, single buffered']
    #allocation3 [shape = 's32[1]{0}', space=sflag, size = 0x4, scoped, tag = 'scoped memory for tpu_custom_call.1']
    #allocation4 [shape = 's32[1]{0}', space=sflag, size = 0x4, scoped, tag = 'scoped memory for tpu_custom_call.1']
    #allocation5 [shape = 'u8[221184]{0}', space=vmem, size = 0x36000, scoped, tag = 'input window, operand 1, single buffered']
    #allocation6 [shape = 's32[1]{0}', space=sflag, size = 0x4, scoped, tag = 'scoped memory for tpu_custom_call.1']
    #allocation7 [shape = 'u8[512]{0}', space=vmem, size = 0x400, scoped, tag = 'output window, operand 0, single buffered']
    %7 = vsyncpa [#allocation3], 0
    %8 = vsyncpa [#allocation6], 0
    %9 = vsyncpa [#allocation4], 0
    // Predicated region
    $region2: #{tpu_custom_call.1} parent=1 // pred_check
      _
    $region3: #{tpu_custom_call.1} parent=1 // pred_check_branch
      %11 = sbr.rel (0) target = $region5
    $region4: #{tpu_custom_call.1} parent=1 // pred_region
      %s13 = ssub.s32 16, 16
      %14 = vsyncadd [#allocation3], %s13
      %s16 = sshll.u32 [#allocation2], 4
      %s17 = int_to_ptr.vmem [resolvable:$true] %s16
      %19 = dma.hbm_to_vmem [thread:$0]  %s0, 16, %s17, [#allocation3]
    $region5: #{tpu_custom_call.1} parent=1 // pred_fallthru
      _
    // Predicated region
    $region6: #{tpu_custom_call.1} parent=1 // pred_check
      _
    $region7: #{tpu_custom_call.1} parent=1 // pred_check_branch
      %21 = sbr.rel (0) target = $region9
    $region8: #{tpu_custom_call.1} parent=1 // pred_region
      %s23 = ssub.s32 6912, 6912
      %24 = vsyncadd [#allocation6], %s23
      %s25 = sshll.u32 [#allocation5], 4
      %s26 = int_to_ptr.vmem [resolvable:$true] %s25
      %31 = dma.hbm_to_vmem [thread:$0]  %s1, 6912, %s26, [#allocation6], 128, 128, 8
    $region9: #{tpu_custom_call.1} parent=1 // pred_fallthru
      _
    // Predicated region
    $region10: #{tpu_custom_call.1} parent=1 // pred_check
      _
    $region11: #{tpu_custom_call.1} parent=1 // pred_check_branch
      %33 = sbr.rel (0) target = $region13
    $region12: #{tpu_custom_call.1} parent=1 // pred_region
      %34 = dma.done [#allocation3], 16
    $region13: #{tpu_custom_call.1} parent=1 // pred_fallthru
      _
    // Predicated region
    $region14: #{tpu_custom_call.1} parent=1 // pred_check
      _
    $region15: #{tpu_custom_call.1} parent=1 // pred_check_branch
      %36 = sbr.rel (0) target = $region17
    $region16: #{tpu_custom_call.1} parent=1 // pred_region
      %37 = dma.done [#allocation6], 6912
    $region17: #{tpu_custom_call.1} parent=1 // pred_fallthru
      _
    %v39 = vld [vmem:[#allocation2] sm:$0x1]
    %v40 = vld [vmem:[#allocation5] sm:$0x33]
    %v41 = vunpack.c.l.bf16 %v40
    %v42 = vunpack.c.h.bf16 %v40
    %v43 = vld [vmem:[#allocation5] sm:$0x22]
    %v44 = vunpack.c.l.bf16 %v43
    %v45 = vunpack.c.h.bf16 %v43
    %v48 = vrot.slane %v44, 3
    %v49 = vrot.slane %v45, 3
    %vm52 = vcmask 23552
    %v54 = vsel %vm52, %v39, 0
    %vm56 = vcmask 1042432
    %v58 = vsel %vm56, %v41, 0
    %v61 = vsel %vm56, %v42, 0
    %63 = vmatprep.subr.mxu0 %v61
    %64 = vmatpush1.msra.mxu0 %v58
    %65 = vmatprep.subr.mxu0 0.0
    %66 = vmatpush1.msra.mxu0 0.0
    %67 = vmatprep.subr.mxu0 0.0
    %68 = vmatpush1.msra.mxu0 0.0
    %69 = vmatprep.subr.mxu0 0.0
    %70 = vmatpush1.msra.mxu0 0.0
    %71 = vmatprep.subr.mxu0 0.0
    %72 = vmatpush1.msra.mxu0 0.0
    %73 = vmatprep.subr.mxu0 0.0
    %74 = vmatpush1.msra.mxu0 0.0
    %75 = vmatprep.subr.mxu0 0.0
    %76 = vmatpush1.msra.mxu0 0.0
    %77 = vmatprep.subr.mxu0 0.0
    %78 = vmatpush1.msra.mxu0 0.0
    %79 = vmatprep.subr.mxu0 0.0
    %80 = vmatpush1.msra.mxu0 0.0
    %81 = vmatprep.subr.mxu0 0.0
    %82 = vmatpush1.msra.mxu0 0.0
    %83 = vmatprep.subr.mxu0 0.0
    %84 = vmatpush1.msra.mxu0 0.0
    %85 = vmatprep.subr.mxu0 0.0
    %86 = vmatpush1.msra.mxu0 0.0
    %87 = vmatprep.subr.mxu0 0.0
    %88 = vmatpush1.msra.mxu0 0.0
    %89 = vmatprep.subr.mxu0 0.0
    %90 = vmatpush1.msra.mxu0 0.0
    %91 = vmatprep.subr.mxu0 0.0
    %92 = vmatpush1.msra.mxu0 0.0
    %93 = vmatprep.subr.mxu0 0.0
    %94 = vmatpush1.msra.mxu0 0.0
    %95 = vmatprep.subr.mxu0 0.0
    %96 = vmatpush1.msra.mxu0 0.0
    %97 = vmatprep.subr.mxu0 0.0
    %98 = vmatpush1.msra.mxu0 0.0
    %99 = vmatprep.subr.mxu0 0.0
    %100 = vmatpush1.msra.mxu0 0.0
    %101 = vmatprep.subr.mxu0 0.0
    %102 = vmatpush1.msra.mxu0 0.0
    %103 = vmatprep.subr.mxu0 0.0
    %104 = vmatpush1.msra.mxu0 0.0
    %105 = vmatprep.subr.mxu0 0.0
    %106 = vmatpush1.msra.mxu0 0.0
    %107 = vmatprep.subr.mxu0 0.0
    %108 = vmatpush1.msra.mxu0 0.0
    %109 = vmatprep.subr.mxu0 0.0
    %110 = vmatpush1.msra.mxu0 0.0
    %111 = vmatprep.subr.mxu0 0.0
    %112 = vmatpush1.msra.mxu0 0.0
    %113 = vmatprep.subr.mxu0 0.0
    %114 = vmatpush1.msra.mxu0 0.0
    %115 = vmatprep.subr.mxu0 0.0
    %116 = vmatpush1.msra.mxu0 0.0
    %117 = vmatprep.subr.mxu0 0.0
    %118 = vmatpush1.msra.mxu0 0.0
    %119 = vmatprep.subr.mxu0 0.0
    %120 = vmatpush1.msra.mxu0 0.0
    %121 = vmatprep.subr.mxu0 0.0
    %122 = vmatpush1.msra.mxu0 0.0
    %123 = vmatprep.subr.mxu0 0.0
    %124 = vmatpush1.msra.mxu0 0.0
    %125 = vmatprep.subr.mxu0 0.0
    %126 = vmatpush1.msra.mxu0 0.0
    %127 = vmatprep.mubr.f32.mxu0 0.0
    %128 = vmatmul.mubr.f32.gmra.mrb[0].mxu0 %v54
    %v129 = vpop.f32.mrb[0].mxu0
    %v130 = vadd.f32 %v48, %v129
    %v131 = vpop.f32.mrb[0].mxu0
    %v132 = vadd.f32 %v49, %v131
    %133 = vdwg.mxu0
    %v134 = vtanh.pop %v130
    %v135 = vmax.f32 %v132, 0.0
    %v136 = vld [vmem:[#allocation5 + $0x190] sm:$0x11]
    %v137 = vunpack.c.l.bf16 %v136
    %v138 = vunpack.c.h.bf16 %v136
    %v139 = vpack.c.bf16 %v134, %v134
    %v140 = vld [vmem:[#allocation5 + $0x10] sm:$0xf]
    %v141 = vld [vmem:[#allocation5 + $0x18] sm:$0xf]
    %v142 = vld [vmem:[#allocation5 + $0x20] sm:$0xf]
    %v143 = vld [vmem:[#allocation5 + $0x28] sm:$0xf]
    %v144 = vld [vmem:[#allocation5 + $0x30] sm:$0xf]
    %v145 = vld [vmem:[#allocation5 + $0x38] sm:$0xf]
    %v146 = vld [vmem:[#allocation5 + $0x40] sm:$0xf]
    %v147 = vld [vmem:[#allocation5 + $0x48] sm:$0xf]
    %v148 = vld [vmem:[#allocation5 + $0x50] sm:$0xf]
    %v149 = vld [vmem:[#allocation5 + $0x58] sm:$0xf]
    %v150 = vld [vmem:[#allocation5 + $0x60] sm:$0xf]
    %v151 = vld [vmem:[#allocation5 + $0x68] sm:$0xf]
    %v152 = vld [vmem:[#allocation5 + $0x70] sm:$0xf]
    %v153 = vld [vmem:[#allocation5 + $0x78] sm:$0xf]
    %v154 = vld [vmem:[#allocation5 + $0x80] sm:$0xf]
    %v155 = vld [vmem:[#allocation5 + $0x88] sm:$0xf]
    %v172 = vunpack.c.l.b16 %v140
    %v173 = vunpack.c.l.b16 %v141
    %v174 = vunpack.c.l.b16 %v142
    %v175 = vunpack.c.l.b16 %v143
    %v176 = vunpack.c.l.b16 %v144
    %v177 = vunpack.c.l.b16 %v145
    %v178 = vunpack.c.l.b16 %v146
    %v179 = vunpack.c.l.b16 %v147
    %v180 = vunpack.c.l.b16 %v148
    %v181 = vunpack.c.l.b16 %v149
    %v182 = vunpack.c.l.b16 %v150
    %v183 = vunpack.c.l.b16 %v151
    %v184 = vunpack.c.l.b16 %v152
    %v185 = vunpack.c.l.b16 %v153
    %v186 = vunpack.c.l.b16 %v154
    %v187 = vunpack.c.l.b16 %v155
    %v188 = vpack.c.b16 %v173, %v172
    %v189 = vpack.c.b16 %v175, %v174
    %v190 = vpack.c.b16 %v177, %v176
    %v191 = vpack.c.b16 %v179, %v178
    %v192 = vpack.c.b16 %v181, %v180
    %v193 = vpack.c.b16 %v183, %v182
    %v194 = vpack.c.b16 %v185, %v184
    %v195 = vpack.c.b16 %v187, %v186
    %204 = vmatprep.subr.bf16.mxu0 0
    %205 = vmatpush1.bf16.msra.mxu0 %v188
    %206 = vmatprep.subr.bf16.mxu0 0
    %207 = vmatpush1.bf16.msra.mxu0 %v189
    %208 = vmatprep.subr.bf16.mxu0 0
    %209 = vmatpush1.bf16.msra.mxu0 %v190
    %210 = vmatprep.subr.bf16.mxu0 0
    %211 = vmatpush1.bf16.msra.mxu0 %v191
    %212 = vmatprep.subr.bf16.mxu0 0
    %213 = vmatpush1.bf16.msra.mxu0 %v192
    %214 = vmatprep.subr.bf16.mxu0 0
    %215 = vmatpush1.bf16.msra.mxu0 %v193
    %216 = vmatprep.subr.bf16.mxu0 0
    %217 = vmatpush1.bf16.msra.mxu0 %v194
    %218 = vmatprep.subr.bf16.mxu0 0
    %219 = vmatpush1.bf16.msra.mxu0 %v195
    %220 = vmatprep.subr.bf16.mxu0 0
    %221 = vmatpush1.bf16.msra.mxu0 0
    %222 = vmatprep.subr.bf16.mxu0 0
    %223 = vmatpush1.bf16.msra.mxu0 0
    %224 = vmatprep.subr.bf16.mxu0 0
    %225 = vmatpush1.bf16.msra.mxu0 0
    %226 = vmatprep.subr.bf16.mxu0 0
    %227 = vmatpush1.bf16.msra.mxu0 0
    %228 = vmatprep.subr.bf16.mxu0 0
    %229 = vmatpush1.bf16.msra.mxu0 0
    %230 = vmatprep.subr.bf16.mxu0 0
    %231 = vmatpush1.bf16.msra.mxu0 0
    %232 = vmatprep.subr.bf16.mxu0 0
    %233 = vmatpush1.bf16.msra.mxu0 0
    %234 = vmatprep.subr.bf16.mxu0 0
    %235 = vmatpush1.bf16.msra.mxu0 0
    %236 = vmatprep.mubr.bf16.mxu0 0
    %237 = vmatmul.mubr.bf16.gmra.mrb[0].mxu0 %v139
    %v238 = vpop.f32.mrb[0].mxu0
    %v239 = vadd.f32 %v137, %v238
    %v240 = vpop.f32.mrb[0].mxu0
    %v241 = vpop.f32.mrb[0].mxu0
    %v242 = vpop.f32.mrb[0].mxu0
    %243 = vdwg.mxu0
    %v244 = vtanh.pop %v239
    %v245 = vpack.c.bf16 %v135, %v135
    %v246 = vld [vmem:[#allocation5 + $0x14] sm:$0xf]
    %v247 = vld [vmem:[#allocation5 + $0x1c] sm:$0xf]
    %v248 = vld [vmem:[#allocation5 + $0x24] sm:$0xf]
    %v249 = vld [vmem:[#allocation5 + $0x2c] sm:$0xf]
    %v250 = vld [vmem:[#allocation5 + $0x34] sm:$0xf]
    %v251 = vld [vmem:[#allocation5 + $0x3c] sm:$0xf]
    %v252 = vld [vmem:[#allocation5 + $0x44] sm:$0xf]
    %v253 = vld [vmem:[#allocation5 + $0x4c] sm:$0xf]
    %v254 = vld [vmem:[#allocation5 + $0x54] sm:$0xf]
    %v255 = vld [vmem:[#allocation5 + $0x5c] sm:$0xf]
    %v256 = vld [vmem:[#allocation5 + $0x64] sm:$0xf]
    %v257 = vld [vmem:[#allocation5 + $0x6c] sm:$0xf]
    %v258 = vld [vmem:[#allocation5 + $0x74] sm:$0xf]
    %v259 = vld [vmem:[#allocation5 + $0x7c] sm:$0xf]
    %v260 = vld [vmem:[#allocation5 + $0x84] sm:$0xf]
    %v261 = vld [vmem:[#allocation5 + $0x8c] sm:$0xf]
    %v278 = vunpack.c.l.b16 %v246
    %v279 = vunpack.c.l.b16 %v247
    %v280 = vunpack.c.l.b16 %v248
    %v281 = vunpack.c.l.b16 %v249
    %v282 = vunpack.c.l.b16 %v250
    %v283 = vunpack.c.l.b16 %v251
    %v284 = vunpack.c.l.b16 %v252
    %v285 = vunpack.c.l.b16 %v253
    %v286 = vunpack.c.l.b16 %v254
    %v287 = vunpack.c.l.b16 %v255
    %v288 = vunpack.c.l.b16 %v256
    %v289 = vunpack.c.l.b16 %v257
    %v290 = vunpack.c.l.b16 %v258
    %v291 = vunpack.c.l.b16 %v259
    %v292 = vunpack.c.l.b16 %v260
    %v293 = vunpack.c.l.b16 %v261
    %v294 = vpack.c.b16 %v279, %v278
    %v295 = vpack.c.b16 %v281, %v280
    %v296 = vpack.c.b16 %v283, %v282
    %v297 = vpack.c.b16 %v285, %v284
    %v298 = vpack.c.b16 %v287, %v286
    %v299 = vpack.c.b16 %v289, %v288
    %v300 = vpack.c.b16 %v291, %v290
    %v301 = vpack.c.b16 %v293, %v292
    %310 = vmatprep.subr.bf16.mxu0 0
    %311 = vmatpush1.bf16.msra.mxu0 %v294
    %312 = vmatprep.subr.bf16.mxu0 0
    %313 = vmatpush1.bf16.msra.mxu0 %v295
    %314 = vmatprep.subr.bf16.mxu0 0
    %315 = vmatpush1.bf16.msra.mxu0 %v296
    %316 = vmatprep.subr.bf16.mxu0 0
    %317 = vmatpush1.bf16.msra.mxu0 %v297
    %318 = vmatprep.subr.bf16.mxu0 0
    %319 = vmatpush1.bf16.msra.mxu0 %v298
    %320 = vmatprep.subr.bf16.mxu0 0
    %321 = vmatpush1.bf16.msra.mxu0 %v299
    %322 = vmatprep.subr.bf16.mxu0 0
    %323 = vmatpush1.bf16.msra.mxu0 %v300
    %324 = vmatprep.subr.bf16.mxu0 0
    %325 = vmatpush1.bf16.msra.mxu0 %v301
    %326 = vmatprep.subr.bf16.mxu0 0
    %327 = vmatpush1.bf16.msra.mxu0 0
    %328 = vmatprep.subr.bf16.mxu0 0
    %329 = vmatpush1.bf16.msra.mxu0 0
    %330 = vmatprep.subr.bf16.mxu0 0
    %331 = vmatpush1.bf16.msra.mxu0 0
    %332 = vmatprep.subr.bf16.mxu0 0
    %333 = vmatpush1.bf16.msra.mxu0 0
    %334 = vmatprep.subr.bf16.mxu0 0
    %335 = vmatpush1.bf16.msra.mxu0 0
    %336 = vmatprep.subr.bf16.mxu0 0
    %337 = vmatpush1.bf16.msra.mxu0 0
    %338 = vmatprep.subr.bf16.mxu0 0
    %339 = vmatpush1.bf16.msra.mxu0 0
    %340 = vmatprep.subr.bf16.mxu0 0
    %341 = vmatpush1.bf16.msra.mxu0 0
    %342 = vmatprep.mubr.bf16.mxu0 0
    %343 = vmatmul.mubr.bf16.gmra.mrb[0].mxu0 %v245
    %v344 = vpop.f32.mrb[0].mxu0
    %v345 = vadd.f32 %v138, %v344
    %v346 = vpop.f32.mrb[0].mxu0
    %v347 = vpop.f32.mrb[0].mxu0
    %v348 = vpop.f32.mrb[0].mxu0
    %349 = vdwg.mxu0
    %v350 = vmax.f32 %v345, 0.0
    %v351 = vpack.c.bf16 %v244, %v244
    %v352 = vld [vmem:[#allocation5 + $0x90] sm:$0xf]
    %v353 = vld [vmem:[#allocation5 + $0x98] sm:$0xf]
    %v354 = vld [vmem:[#allocation5 + $0xa0] sm:$0xf]
    %v355 = vld [vmem:[#allocation5 + $0xa8] sm:$0xf]
    %v356 = vld [vmem:[#allocation5 + $0xb0] sm:$0xf]
    %v357 = vld [vmem:[#allocation5 + $0xb8] sm:$0xf]
    %v358 = vld [vmem:[#allocation5 + $0xc0] sm:$0xf]
    %v359 = vld [vmem:[#allocation5 + $0xc8] sm:$0xf]
    %v360 = vld [vmem:[#allocation5 + $0xd0] sm:$0xf]
    %v361 = vld [vmem:[#allocation5 + $0xd8] sm:$0xf]
    %v362 = vld [vmem:[#allocation5 + $0xe0] sm:$0xf]
    %v363 = vld [vmem:[#allocation5 + $0xe8] sm:$0xf]
    %v364 = vld [vmem:[#allocation5 + $0xf0] sm:$0xf]
    %v365 = vld [vmem:[#allocation5 + $0xf8] sm:$0xf]
    %v366 = vld [vmem:[#allocation5 + $0x100] sm:$0xf]
    %v367 = vld [vmem:[#allocation5 + $0x108] sm:$0xf]
    %v384 = vunpack.c.l.b16 %v352
    %v385 = vunpack.c.l.b16 %v353
    %v386 = vunpack.c.l.b16 %v354
    %v387 = vunpack.c.l.b16 %v355
    %v388 = vunpack.c.l.b16 %v356
    %v389 = vunpack.c.l.b16 %v357
    %v390 = vunpack.c.l.b16 %v358
    %v391 = vunpack.c.l.b16 %v359
    %v392 = vunpack.c.l.b16 %v360
    %v393 = vunpack.c.l.b16 %v361
    %v394 = vunpack.c.l.b16 %v362
    %v395 = vunpack.c.l.b16 %v363
    %v396 = vunpack.c.l.b16 %v364
    %v397 = vunpack.c.l.b16 %v365
    %v398 = vunpack.c.l.b16 %v366
    %v399 = vunpack.c.l.b16 %v367
    %v400 = vpack.c.b16 %v385, %v384
    %v401 = vpack.c.b16 %v387, %v386
    %v402 = vpack.c.b16 %v389, %v388
    %v403 = vpack.c.b16 %v391, %v390
    %v404 = vpack.c.b16 %v393, %v392
    %v405 = vpack.c.b16 %v395, %v394
    %v406 = vpack.c.b16 %v397, %v396
    %v407 = vpack.c.b16 %v399, %v398
    %v417 = vrot.slane %v137, 1
    %419 = vmatprep.subr.bf16.mxu0 0
    %420 = vmatpush1.bf16.msra.mxu0 %v400
    %421 = vmatprep.subr.bf16.mxu0 0
    %422 = vmatpush1.bf16.msra.mxu0 %v401
    %423 = vmatprep.subr.bf16.mxu0 0
    %424 = vmatpush1.bf16.msra.mxu0 %v402
    %425 = vmatprep.subr.bf16.mxu0 0
    %426 = vmatpush1.bf16.msra.mxu0 %v403
    %427 = vmatprep.subr.bf16.mxu0 0
    %428 = vmatpush1.bf16.msra.mxu0 %v404
    %429 = vmatprep.subr.bf16.mxu0 0
    %430 = vmatpush1.bf16.msra.mxu0 %v405
    %431 = vmatprep.subr.bf16.mxu0 0
    %432 = vmatpush1.bf16.msra.mxu0 %v406
    %433 = vmatprep.subr.bf16.mxu0 0
    %434 = vmatpush1.bf16.msra.mxu0 %v407
    %435 = vmatprep.subr.bf16.mxu0 0
    %436 = vmatpush1.bf16.msra.mxu0 0
    %437 = vmatprep.subr.bf16.mxu0 0
    %438 = vmatpush1.bf16.msra.mxu0 0
    %439 = vmatprep.subr.bf16.mxu0 0
    %440 = vmatpush1.bf16.msra.mxu0 0
    %441 = vmatprep.subr.bf16.mxu0 0
    %442 = vmatpush1.bf16.msra.mxu0 0
    %443 = vmatprep.subr.bf16.mxu0 0
    %444 = vmatpush1.bf16.msra.mxu0 0
    %445 = vmatprep.subr.bf16.mxu0 0
    %446 = vmatpush1.bf16.msra.mxu0 0
    %447 = vmatprep.subr.bf16.mxu0 0
    %448 = vmatpush1.bf16.msra.mxu0 0
    %449 = vmatprep.subr.bf16.mxu0 0
    %450 = vmatpush1.bf16.msra.mxu0 0
    %451 = vmatprep.mubr.bf16.mxu0 0
    %452 = vmatmul.mubr.bf16.gmra.mrb[0].mxu0 %v351
    %v453 = vpop.f32.mrb[0].mxu0
    %v454 = vadd.f32 %v417, %v453
    %v455 = vpop.f32.mrb[0].mxu0
    %v456 = vpop.f32.mrb[0].mxu0
    %v457 = vpop.f32.mrb[0].mxu0
    %458 = vdwg.mxu0
    %v459 = vtanh.pop %v454
    %v460 = vpack.c.bf16 %v350, %v350
    %v461 = vld [vmem:[#allocation5 + $0x94] sm:$0xf]
    %v462 = vld [vmem:[#allocation5 + $0x9c] sm:$0xf]
    %v463 = vld [vmem:[#allocation5 + $0xa4] sm:$0xf]
    %v464 = vld [vmem:[#allocation5 + $0xac] sm:$0xf]
    %v465 = vld [vmem:[#allocation5 + $0xb4] sm:$0xf]
    %v466 = vld [vmem:[#allocation5 + $0xbc] sm:$0xf]
    %v467 = vld [vmem:[#allocation5 + $0xc4] sm:$0xf]
    %v468 = vld [vmem:[#allocation5 + $0xcc] sm:$0xf]
    %v469 = vld [vmem:[#allocation5 + $0xd4] sm:$0xf]
    %v470 = vld [vmem:[#allocation5 + $0xdc] sm:$0xf]
    %v471 = vld [vmem:[#allocation5 + $0xe4] sm:$0xf]
    %v472 = vld [vmem:[#allocation5 + $0xec] sm:$0xf]
    %v473 = vld [vmem:[#allocation5 + $0xf4] sm:$0xf]
    %v474 = vld [vmem:[#allocation5 + $0xfc] sm:$0xf]
    %v475 = vld [vmem:[#allocation5 + $0x104] sm:$0xf]
    %v476 = vld [vmem:[#allocation5 + $0x10c] sm:$0xf]
    %v493 = vunpack.c.l.b16 %v461
    %v494 = vunpack.c.l.b16 %v462
    %v495 = vunpack.c.l.b16 %v463
    %v496 = vunpack.c.l.b16 %v464
    %v497 = vunpack.c.l.b16 %v465
    %v498 = vunpack.c.l.b16 %v466
    %v499 = vunpack.c.l.b16 %v467
    %v500 = vunpack.c.l.b16 %v468
    %v501 = vunpack.c.l.b16 %v469
    %v502 = vunpack.c.l.b16 %v470
    %v503 = vunpack.c.l.b16 %v471
    %v504 = vunpack.c.l.b16 %v472
    %v505 = vunpack.c.l.b16 %v473
    %v506 = vunpack.c.l.b16 %v474
    %v507 = vunpack.c.l.b16 %v475
    %v508 = vunpack.c.l.b16 %v476
    %v509 = vpack.c.b16 %v494, %v493
    %v510 = vpack.c.b16 %v496, %v495
    %v511 = vpack.c.b16 %v498, %v497
    %v512 = vpack.c.b16 %v500, %v499
    %v513 = vpack.c.b16 %v502, %v501
    %v514 = vpack.c.b16 %v504, %v503
    %v515 = vpack.c.b16 %v506, %v505
    %v516 = vpack.c.b16 %v508, %v507
    %v526 = vrot.slane %v138, 1
    %528 = vmatprep.subr.bf16.mxu0 0
    %529 = vmatpush1.bf16.msra.mxu0 %v509
    %530 = vmatprep.subr.bf16.mxu0 0
    %531 = vmatpush1.bf16.msra.mxu0 %v510
    %532 = vmatprep.subr.bf16.mxu0 0
    %533 = vmatpush1.bf16.msra.mxu0 %v511
    %534 = vmatprep.subr.bf16.mxu0 0
    %535 = vmatpush1.bf16.msra.mxu0 %v512
    %536 = vmatprep.subr.bf16.mxu0 0
    %537 = vmatpush1.bf16.msra.mxu0 %v513
    %538 = vmatprep.subr.bf16.mxu0 0
    %539 = vmatpush1.bf16.msra.mxu0 %v514
    %540 = vmatprep.subr.bf16.mxu0 0
    %541 = vmatpush1.bf16.msra.mxu0 %v515
    %542 = vmatprep.subr.bf16.mxu0 0
    %543 = vmatpush1.bf16.msra.mxu0 %v516
    %544 = vmatprep.subr.bf16.mxu0 0
    %545 = vmatpush1.bf16.msra.mxu0 0
    %546 = vmatprep.subr.bf16.mxu0 0
    %547 = vmatpush1.bf16.msra.mxu0 0
    %548 = vmatprep.subr.bf16.mxu0 0
    %549 = vmatpush1.bf16.msra.mxu0 0
    %550 = vmatprep.subr.bf16.mxu0 0
    %551 = vmatpush1.bf16.msra.mxu0 0
    %552 = vmatprep.subr.bf16.mxu0 0
    %553 = vmatpush1.bf16.msra.mxu0 0
    %554 = vmatprep.subr.bf16.mxu0 0
    %555 = vmatpush1.bf16.msra.mxu0 0
    %556 = vmatprep.subr.bf16.mxu0 0
    %557 = vmatpush1.bf16.msra.mxu0 0
    %558 = vmatprep.subr.bf16.mxu0 0
    %559 = vmatpush1.bf16.msra.mxu0 0
    %560 = vmatprep.mubr.bf16.mxu0 0
    %561 = vmatmul.mubr.bf16.gmra.mrb[0].mxu0 %v460
    %v562 = vpop.f32.mrb[0].mxu0
    %v563 = vadd.f32 %v526, %v562
    %v564 = vpop.f32.mrb[0].mxu0
    %v565 = vpop.f32.mrb[0].mxu0
    %v566 = vpop.f32.mrb[0].mxu0
    %567 = vdwg.mxu0
    %v568 = vmax.f32 %v563, 0.0
    %v569 = vld [vmem:[#allocation5 + $0x190] sm:$0x22]
    %v570 = vunpack.c.l.bf16 %v569
    %v571 = vunpack.c.h.bf16 %v569
    %v572 = vpack.c.bf16 %v459, %v459
    %v573 = vld [vmem:[#allocation5 + $0x110] sm:$0xf]
    %v574 = vld [vmem:[#allocation5 + $0x118] sm:$0xf]
    %v575 = vld [vmem:[#allocation5 + $0x120] sm:$0xf]
    %v576 = vld [vmem:[#allocation5 + $0x128] sm:$0xf]
    %v577 = vld [vmem:[#allocation5 + $0x130] sm:$0xf]
    %v578 = vld [vmem:[#allocation5 + $0x138] sm:$0xf]
    %v579 = vld [vmem:[#allocation5 + $0x140] sm:$0xf]
    %v580 = vld [vmem:[#allocation5 + $0x148] sm:$0xf]
    %v581 = vld [vmem:[#allocation5 + $0x150] sm:$0xf]
    %v582 = vld [vmem:[#allocation5 + $0x158] sm:$0xf]
    %v583 = vld [vmem:[#allocation5 + $0x160] sm:$0xf]
    %v584 = vld [vmem:[#allocation5 + $0x168] sm:$0xf]
    %v585 = vld [vmem:[#allocation5 + $0x170] sm:$0xf]
    %v586 = vld [vmem:[#allocation5 + $0x178] sm:$0xf]
    %v587 = vld [vmem:[#allocation5 + $0x180] sm:$0xf]
    %v588 = vld [vmem:[#allocation5 + $0x188] sm:$0xf]
    %v605 = vunpack.c.l.b16 %v573
    %v606 = vunpack.c.l.b16 %v574
    %v607 = vunpack.c.l.b16 %v575
    %v608 = vunpack.c.l.b16 %v576
    %v609 = vunpack.c.l.b16 %v577
    %v610 = vunpack.c.l.b16 %v578
    %v611 = vunpack.c.l.b16 %v579
    %v612 = vunpack.c.l.b16 %v580
    %v613 = vunpack.c.l.b16 %v581
    %v614 = vunpack.c.l.b16 %v582
    %v615 = vunpack.c.l.b16 %v583
    %v616 = vunpack.c.l.b16 %v584
    %v617 = vunpack.c.l.b16 %v585
    %v618 = vunpack.c.l.b16 %v586
    %v619 = vunpack.c.l.b16 %v587
    %v620 = vunpack.c.l.b16 %v588
    %v621 = vpack.c.b16 %v606, %v605
    %v622 = vpack.c.b16 %v608, %v607
    %v623 = vpack.c.b16 %v610, %v609
    %v624 = vpack.c.b16 %v612, %v611
    %v625 = vpack.c.b16 %v614, %v613
    %v626 = vpack.c.b16 %v616, %v615
    %v627 = vpack.c.b16 %v618, %v617
    %v628 = vpack.c.b16 %v620, %v619
    %v638 = vrot.slane %v570, 2
    %640 = vmatprep.subr.bf16.mxu0 0
    %641 = vmatpush1.bf16.msra.mxu0 %v621
    %642 = vmatprep.subr.bf16.mxu0 0
    %643 = vmatpush1.bf16.msra.mxu0 %v622
    %644 = vmatprep.subr.bf16.mxu0 0
    %645 = vmatpush1.bf16.msra.mxu0 %v623
    %646 = vmatprep.subr.bf16.mxu0 0
    %647 = vmatpush1.bf16.msra.mxu0 %v624
    %648 = vmatprep.subr.bf16.mxu0 0
    %649 = vmatpush1.bf16.msra.mxu0 %v625
    %650 = vmatprep.subr.bf16.mxu0 0
    %651 = vmatpush1.bf16.msra.mxu0 %v626
    %652 = vmatprep.subr.bf16.mxu0 0
    %653 = vmatpush1.bf16.msra.mxu0 %v627
    %654 = vmatprep.subr.bf16.mxu0 0
    %655 = vmatpush1.bf16.msra.mxu0 %v628
    %656 = vmatprep.subr.bf16.mxu0 0
    %657 = vmatpush1.bf16.msra.mxu0 0
    %658 = vmatprep.subr.bf16.mxu0 0
    %659 = vmatpush1.bf16.msra.mxu0 0
    %660 = vmatprep.subr.bf16.mxu0 0
    %661 = vmatpush1.bf16.msra.mxu0 0
    %662 = vmatprep.subr.bf16.mxu0 0
    %663 = vmatpush1.bf16.msra.mxu0 0
    %664 = vmatprep.subr.bf16.mxu0 0
    %665 = vmatpush1.bf16.msra.mxu0 0
    %666 = vmatprep.subr.bf16.mxu0 0
    %667 = vmatpush1.bf16.msra.mxu0 0
    %668 = vmatprep.subr.bf16.mxu0 0
    %669 = vmatpush1.bf16.msra.mxu0 0
    %670 = vmatprep.subr.bf16.mxu0 0
    %671 = vmatpush1.bf16.msra.mxu0 0
    %672 = vmatprep.mubr.bf16.mxu0 0
    %673 = vmatmul.mubr.bf16.gmra.mrb[0].mxu0 %v572
    %v674 = vpop.f32.mrb[0].mxu0
    %v675 = vadd.f32 %v638, %v674
    %v676 = vpop.f32.mrb[0].mxu0
    %v677 = vpop.f32.mrb[0].mxu0
    %v678 = vpop.f32.mrb[0].mxu0
    %679 = vdwg.mxu0
    %v680 = vtanh.pop %v675
    %v681 = vpack.c.bf16 %v568, %v568
    %v682 = vld [vmem:[#allocation5 + $0x114] sm:$0xf]
    %v683 = vld [vmem:[#allocation5 + $0x11c] sm:$0xf]
    %v684 = vld [vmem:[#allocation5 + $0x124] sm:$0xf]
    %v685 = vld [vmem:[#allocation5 + $0x12c] sm:$0xf]
    %v686 = vld [vmem:[#allocation5 + $0x134] sm:$0xf]
    %v687 = vld [vmem:[#allocation5 + $0x13c] sm:$0xf]
    %v688 = vld [vmem:[#allocation5 + $0x144] sm:$0xf]
    %v689 = vld [vmem:[#allocation5 + $0x14c] sm:$0xf]
    %v690 = vld [vmem:[#allocation5 + $0x154] sm:$0xf]
    %v691 = vld [vmem:[#allocation5 + $0x15c] sm:$0xf]
    %v692 = vld [vmem:[#allocation5 + $0x164] sm:$0xf]
    %v693 = vld [vmem:[#allocation5 + $0x16c] sm:$0xf]
    %v694 = vld [vmem:[#allocation5 + $0x174] sm:$0xf]
    %v695 = vld [vmem:[#allocation5 + $0x17c] sm:$0xf]
    %v696 = vld [vmem:[#allocation5 + $0x184] sm:$0xf]
    %v697 = vld [vmem:[#allocation5 + $0x18c] sm:$0xf]
    %v714 = vunpack.c.l.b16 %v682
    %v715 = vunpack.c.l.b16 %v683
    %v716 = vunpack.c.l.b16 %v684
    %v717 = vunpack.c.l.b16 %v685
    %v718 = vunpack.c.l.b16 %v686
    %v719 = vunpack.c.l.b16 %v687
    %v720 = vunpack.c.l.b16 %v688
    %v721 = vunpack.c.l.b16 %v689
    %v722 = vunpack.c.l.b16 %v690
    %v723 = vunpack.c.l.b16 %v691
    %v724 = vunpack.c.l.b16 %v692
    %v725 = vunpack.c.l.b16 %v693
    %v726 = vunpack.c.l.b16 %v694
    %v727 = vunpack.c.l.b16 %v695
    %v728 = vunpack.c.l.b16 %v696
    %v729 = vunpack.c.l.b16 %v697
    %v730 = vpack.c.b16 %v715, %v714
    %v731 = vpack.c.b16 %v717, %v716
    %v732 = vpack.c.b16 %v719, %v718
    %v733 = vpack.c.b16 %v721, %v720
    %v734 = vpack.c.b16 %v723, %v722
    %v735 = vpack.c.b16 %v725, %v724
    %v736 = vpack.c.b16 %v727, %v726
    %v737 = vpack.c.b16 %v729, %v728
    %v747 = vrot.slane %v571, 2
    %749 = vmatprep.subr.bf16.mxu0 0
    %750 = vmatpush1.bf16.msra.mxu0 %v730
    %751 = vmatprep.subr.bf16.mxu0 0
    %752 = vmatpush1.bf16.msra.mxu0 %v731
    %753 = vmatprep.subr.bf16.mxu0 0
    %754 = vmatpush1.bf16.msra.mxu0 %v732
    %755 = vmatprep.subr.bf16.mxu0 0
    %756 = vmatpush1.bf16.msra.mxu0 %v733
    %757 = vmatprep.subr.bf16.mxu0 0
    %758 = vmatpush1.bf16.msra.mxu0 %v734
    %759 = vmatprep.subr.bf16.mxu0 0
    %760 = vmatpush1.bf16.msra.mxu0 %v735
    %761 = vmatprep.subr.bf16.mxu0 0
    %762 = vmatpush1.bf16.msra.mxu0 %v736
    %763 = vmatprep.subr.bf16.mxu0 0
    %764 = vmatpush1.bf16.msra.mxu0 %v737
    %765 = vmatprep.subr.bf16.mxu0 0
    %766 = vmatpush1.bf16.msra.mxu0 0
    %767 = vmatprep.subr.bf16.mxu0 0
    %768 = vmatpush1.bf16.msra.mxu0 0
    %769 = vmatprep.subr.bf16.mxu0 0
    %770 = vmatpush1.bf16.msra.mxu0 0
    %771 = vmatprep.subr.bf16.mxu0 0
    %772 = vmatpush1.bf16.msra.mxu0 0
    %773 = vmatprep.subr.bf16.mxu0 0
    %774 = vmatpush1.bf16.msra.mxu0 0
    %775 = vmatprep.subr.bf16.mxu0 0
    %776 = vmatpush1.bf16.msra.mxu0 0
    %777 = vmatprep.subr.bf16.mxu0 0
    %778 = vmatpush1.bf16.msra.mxu0 0
    %779 = vmatprep.subr.bf16.mxu0 0
    %780 = vmatpush1.bf16.msra.mxu0 0
    %781 = vmatprep.mubr.bf16.mxu0 0
    %782 = vmatmul.mubr.bf16.gmra.mrb[0].mxu0 %v681
    %v783 = vpop.f32.mrb[0].mxu0
    %v784 = vadd.f32 %v747, %v783
    %v785 = vpop.f32.mrb[0].mxu0
    %v786 = vpop.f32.mrb[0].mxu0
    %v787 = vpop.f32.mrb[0].mxu0
    %788 = vdwg.mxu0
    %v789 = vmax.f32 %v784, 0.0
    %v790 = vld [vmem:[#allocation5 + $0x1a0] sm:$0x11]
    %v791 = vunpack.c.l.bf16 %v790
    %v792 = vunpack.c.h.bf16 %v790
    %v793 = vmul.f32 %v680, %v791
    %vm794 = vcmask 1040384
    %v795 = vsel %vm794, %v793, 0.0
    %796 = vadd.xlane.f32.xlu0 %v795
    %v797 = vpop.xlane.xlu0 %796
    %v799 = vrot.slane %v791, 1
    %v801 = vadd.f32 %v797, %v799
    %v802 = vmul.f32 %v789, %v792
    %v803 = vsel %vm794, %v802, 0.0
    %804 = vadd.xlane.f32.xlu0 %v803
    %v805 = vpop.xlane.xlu0 %804
    %v807 = vrot.slane %v792, 1
    %v809 = vadd.f32 %v805, %v807
    %v810 = vmul.f32 %v809, 0.5
    %v811 = vmul.f32 %v810, 1.442695
    %v812 = vpow.pop %v811
    %v813 = vadd.f32 %v812, 1e-05
    %v814 = vlaneseq
    %v815 = vshrl.u32 %v814, 7
    %v816 = vsub.s32 0, %v815
    %v817 = vrot.slane %v39, %v816
    %818 = vrot.lane.b32.xlu0 %v817, 125
    %v819 = vpop.permute.xlu0 %818
    %v821 = vmul.f32 %v813, %v819
    %v822 = vadd.f32 %v801, %v821
    %v823 = vlaneseq
    %v824 = vand.u32 %v823, 127
    %vm825 = vcmp.lt.s32.totalorder %v824, 1
    %vm826 = vcmp.lt.s32.totalorder %v824, 2
    %828 = vset.pattern.permute.xlu0 0
    %829 = vperm.xlu0 %828, %v801
    %v830 = vpop.permute.xlu0 %829
    %833 = vset.pattern.permute.xlu0 0
    %834 = vperm.xlu0 %833, %v809
    %v835 = vpop.permute.xlu0 %834
    %v837 = vsel %vm826, %v830, %v835
    %839 = vset.pattern.permute.xlu0 0
    %840 = vperm.xlu0 %839, %v822
    %v841 = vpop.permute.xlu0 %840
    %v843 = vsel %vm825, %v841, %v837
    %vm844 = vcmask 16384
    %845 = vst.msk [vmem:[#allocation7] sm:$0x1] %vm844, %v843
    // Predicated region
    $region18: #{tpu_custom_call.1} parent=1 // pred_check
      _
    $region19: #{tpu_custom_call.1} parent=1 // pred_check_branch
      %847 = sbr.rel (0) target = $region21
    $region20: #{tpu_custom_call.1} parent=1 // pred_region
      %s849 = ssub.s32 16, 16
      %850 = vsyncadd [#allocation4], %s849
      %s852 = sshll.u32 [#allocation7], 4
      %s853 = int_to_ptr.vmem [resolvable:$true] %s852
      %855 = dma.vmem_to_hbm [thread:$0]  %s853, 16, %s2, [#allocation4]
    $region21: #{tpu_custom_call.1} parent=1 // pred_fallthru
      _
    // Predicated region
    $region22: #{tpu_custom_call.1} parent=1 // pred_check
      _
    $region23: #{tpu_custom_call.1} parent=1 // pred_check_branch
      %857 = sbr.rel (0) target = $region25
    $region24: #{tpu_custom_call.1} parent=1 // pred_region
      %858 = dma.done [#allocation4], 16
    $region25: #{tpu_custom_call.1} parent=1 // pred_fallthru
      _
    %859 = vsyncpa [#allocation3], 1
    %860 = vsyncpa [#allocation6], 1
    %861 = vsyncpa [#allocation4], 1

</llo_original>
